<compile_context>
chip_gen: v7x
topology: tpu7x:2x2x1
jax: 0.10.0
libtpu: 0.0.40
codegen_flags: <defaults>
</compile_context>

<pallas_src>
import jax
import jax.numpy as jnp
from jax.experimental import pallas as pl
from jax.experimental.pallas import tpu as pltpu


def _softmax_entropy_kernel(x_ref, o_ref):
    """Per-row entropy of softmax(logits) for one (TN, C) tile.

    x_ref: (TN, C) logits tile (any float dtype; cast to f32 here)
    o_ref: (TN, 1) f32 per-sample entropies
    """
    x = x_ref[...].astype(jnp.float32)
    m = jnp.max(x, axis=1, keepdims=True)          # XLU row max
    z = x - m
    e = jnp.exp(z)                                 # EUP
    s = jnp.sum(e, axis=1, keepdims=True)          # XLU row sum
    ez = jnp.sum(e * z, axis=1, keepdims=True)     # VPU mul + XLU row sum
    # -(softmax(x) * log_softmax(x)).sum(1) == log(s) - sum(e*z)/s
    o_ref[...] = jnp.log(s) - ez * pl.reciprocal(s, approx=True)


def _choose_block_rows(n, c, dtype, target_bytes=2 * 1024 * 1024, max_rows=8192):
    """Row-tile size giving ~2 MiB input blocks (Pallas double-buffers them)."""
    itemsize = jnp.dtype(dtype).itemsize
    # native sublane granularity: 8 for 4-byte, 16 for 2-byte, 32 for 1-byte dtypes
    mult = 8 * max(1, 4 // max(1, itemsize))
    rows = target_bytes // max(1, c * itemsize)
    rows = max(mult, (rows // mult) * mult)
    rows = min(rows, max_rows)
    if n <= rows:
        # Single block spanning the whole (small) batch; full-dim blocks are
        # always legal regardless of the (8, 128) divisibility rule.
        return n
    return rows


def softmax_entropy(x: jax.Array, block_rows: int | None = None) -> jax.Array:
    """Pallas version of: -(x.softmax(1) * x.log_softmax(1)).sum(1).

    x: (N, C) logits (f32 / bf16 / ...). Returns (N,) float32 entropies.
    block_rows: optional row-tile override (testing knob); must be a multiple
      of the dtype's sublane granularity unless it equals N.
    """
    assert x.ndim == 2, f"expected (N, C) logits, got {x.shape}"
    n, c = x.shape
    tn = block_rows if block_rows is not None else _choose_block_rows(n, c, x.dtype)
    grid = (pl.cdiv(n, tn),)
    out = pl.pallas_call(
        _softmax_entropy_kernel,
        out_shape=jax.ShapeDtypeStruct((n, 1), jnp.float32),
        grid=grid,
        in_specs=[pl.BlockSpec((tn, c), lambda i: (i, 0))],
        out_specs=pl.BlockSpec((tn, 1), lambda i: (i, 0)),
        compiler_params=pltpu.CompilerParams(
            # independent row tiles -> megacore-shardable on v7x, no-op elsewhere
            dimension_semantics=("parallel",),
        ),
    )(x)
    return out[:, 0]


def weight_reduce_loss(loss, weight=None, reduction="mean", avg_factor=None):
    """Same semantics as mmcls.models.losses.utils.weight_reduce_loss."""
    if weight is not None:
        loss = loss * weight.astype(jnp.float32)
    if avg_factor is None:
        if reduction == "mean":
            return jnp.mean(loss)
        elif reduction == "sum":
            return jnp.sum(loss)
        elif reduction == "none":
            return loss
        else:
            raise ValueError(f"bad reduction {reduction}")
    else:
        if reduction == "mean":
            return jnp.sum(loss) / avg_factor
        elif reduction == "none":
            return loss
        else:
            raise ValueError("avg_factor can not be used with reduction='sum'")


class SoftmaxEntropyLoss:
    """JAX/Pallas port of mmcls SoftmaxEntropyLoss (no learnable params)."""

    def __init__(self, reduction="mean", loss_weight=1.0):
        self.reduction = reduction
        self.loss_weight = loss_weight

    def __call__(self, cls_score, gt_label=None, weight=None,
                 avg_factor=None, reduction_override=None):
        assert reduction_override in (None, "none", "mean", "sum")
        reduction = reduction_override if reduction_override else self.reduction
        loss = softmax_entropy(cls_score)
        loss_cls = self.loss_weight * weight_reduce_loss(
            loss, weight=weight, reduction=reduction, avg_factor=avg_factor)
        return loss_cls


if __name__ == "__main__":
    key = jax.random.PRNGKey(0)
    k1, k2, k3 = jax.random.split(key, 3)

    def _ref_entropy(x):
        x32 = x.astype(jnp.float32)
        sm = jax.nn.softmax(x32, axis=1)
        lsm = jax.nn.log_softmax(x32, axis=1)
        return -(sm * lsm).sum(axis=1)

    batch, num_classes = 8, 32
    cls_score = jax.random.normal(k1, (batch, num_classes), dtype=jnp.float32)
    gt_label = jax.random.randint(k2, (batch,), 0, num_classes)  # unused by loss

    loss_fn = SoftmaxEntropyLoss(reduction="mean", loss_weight=1.0)

    # 1) default: mean reduction, f32 logits
    loss = jax.block_until_ready(loss_fn(cls_score, gt_label))
    ref = jnp.mean(_ref_entropy(cls_score))
    assert jnp.allclose(loss, ref, atol=1e-2, rtol=1e-2), (loss, ref)

    # 2) 'none' reduction + per-sample weight, batch not a multiple of 8
    n2 = 12
    x2 = jax.random.normal(k3, (n2, num_classes), dtype=jnp.float32)
    w2 = jnp.linspace(0.0, 1.0, n2, dtype=jnp.float32)
    loss2 = jax.block_until_ready(
        loss_fn(x2, None, weight=w2, reduction_override="none"))
    ref2 = _ref_entropy(x2) * w2
    assert loss2.shape == (n2,)
    assert jnp.allclose(loss2, ref2, atol=1e-2, rtol=1e-2), (loss2, ref2)

    # 3) force the tiled, multi-grid-step path with a ragged tail at small scale
    n4 = 20
    x4 = jax.random.normal(k2, (n4, num_classes), dtype=jnp.float32)
    ent4 = jax.block_until_ready(softmax_entropy(x4, block_rows=8))
    ref4 = _ref_entropy(x4)
    assert jnp.allclose(ent4, ref4, atol=1e-2, rtol=1e-2), (ent4, ref4)

    # 4) bf16 logits streamed directly into the kernel (cast to f32 inside)
    x3 = cls_score.astype(jnp.bfloat16)
    loss3 = jax.block_until_ready(loss_fn(x3, gt_label, reduction_override="sum"))
    ref3 = jnp.sum(_ref_entropy(x3))
    assert jnp.allclose(loss3, ref3, atol=5e-2, rtol=5e-2), (loss3, ref3)

    print("KERNEL_OK")
</pallas_src>

<mosaic_0001>
module attributes {stable_mosaic.version = 11 : i64} {
  func.func @_softmax_entropy_kernel(%arg0: i32, %arg1: memref<8x32xf32, #tpu.memory_space<vmem>>, %arg2: memref<8x1xf32, #tpu.memory_space<vmem>>) attributes {dimension_semantics = [#tpu.dimension_semantics<parallel>], iteration_bounds = array<i64: 1>, scalar_prefetch = 0 : i64, scratch_operands = 0 : i64, tpu.core_type = #tpu.core_type<tc>, window_params = [{transform_indices = @transform_0, window_bounds = array<i64: 8, 32>}, {transform_indices = @transform_1, window_bounds = array<i64: 8, 1>}]} {
    %c0 = arith.constant 0 : index
    %c0_0 = arith.constant 0 : index
    %0 = vector.load %arg1[%c0, %c0_0] : memref<8x32xf32, #tpu.memory_space<vmem>>, vector<8x32xf32>
    %cst = arith.constant dense<0xFF800000> : vector<8xf32>
    %1 = vector.multi_reduction <maximumf>, %0, %cst [1] : vector<8x32xf32> to vector<8xf32>
    %2 = vector.shape_cast %1 : vector<8xf32> to vector<8x1xf32>
    %3 = vector.broadcast %2 : vector<8x1xf32> to vector<8x32xf32>
    %4 = arith.subf %0, %3 : vector<8x32xf32>
    %5 = math.exp %4 : vector<8x32xf32>
    %cst_1 = arith.constant dense<0.000000e+00> : vector<8xf32>
    %6 = vector.multi_reduction <add>, %5, %cst_1 [1] : vector<8x32xf32> to vector<8xf32>
    %7 = vector.shape_cast %6 : vector<8xf32> to vector<8x1xf32>
    %8 = arith.mulf %5, %4 : vector<8x32xf32>
    %cst_2 = arith.constant dense<0.000000e+00> : vector<8xf32>
    %9 = vector.multi_reduction <add>, %8, %cst_2 [1] : vector<8x32xf32> to vector<8xf32>
    %10 = vector.shape_cast %9 : vector<8xf32> to vector<8x1xf32>
    %11 = math.log %7 : vector<8x1xf32>
    %12 = tpu.reciprocal %7 {approx = true} : vector<8x1xf32> -> vector<8x1xf32>
    %13 = arith.mulf %10, %12 : vector<8x1xf32>
    %14 = arith.subf %11, %13 : vector<8x1xf32>
    %c0_3 = arith.constant 0 : index
    %c0_4 = arith.constant 0 : index
    %15 = vector.load %arg2[%c0_3, %c0_4] : memref<8x1xf32, #tpu.memory_space<vmem>>, vector<8x1xf32>
    tpu.vector_store %arg2[%c0_3, %c0_4], %14 {strides = array<i32>} : memref<8x1xf32, #tpu.memory_space<vmem>>, vector<8x1xf32>,
    return
  }
  func.func @transform_0(%arg0: i32) -> (i32, i32) {
    %c0_i32 = arith.constant 0 : i32
    %c0_i32_0 = arith.constant 0 : i32
    return %arg0, %c0_i32 : i32, i32
  }
  func.func @transform_1(%arg0: i32) -> (i32, i32) {
    %c0_i32 = arith.constant 0 : i32
    %c0_i32_0 = arith.constant 0 : i32
    return %arg0, %c0_i32 : i32, i32
  }
}

</mosaic_0001>

<llo_original>
// kernel: tpu_custom_call.1
$region0: #{tpu_custom_call.1}
  #allocation0 [shape = 'u32[]', space=smem, size = 0x4, offset = 0x4, fixed_abs, tag = 'smem constant byte address 0x4 - core index']
  #allocation1 [shape = 'u32[144,128]{1,0:T(1,128)}', space=vmem, size = 0x12000, scoped, tag = 'internal scratch']
  %s0 = inlined_call_operand.hbm [shape: f32[8,32], index: 0, kind: input, shape index: {}]
  %s1 = inlined_call_operand.vmem [shape: f32[8,1], index: 1, kind: output, shape index: {}]
  %s2 = sld [smem:[#allocation0]]
  $region18: #{tpu_custom_call.1} parent=0
    _
  %s4 = ssub.s32 1, %s2
  %s5 = scalar_select 0, %s4, %s2
  $region1: #{tpu_custom_call.1} parent=0
    #allocation2 [shape = 'u8[4096]{0}', space=vmem, size = 0x1000, scoped, tag = 'input window, operand 0, single buffered']
    #allocation3 [shape = 's32[1]{0}', space=sflag, size = 0x4, scoped, tag = 'scoped memory for tpu_custom_call.1']
    %6 = vsyncpa [#allocation3], 0
    // Predicated region
    $region2: #{tpu_custom_call.1} parent=1 // pred_check
      _
    $region3: #{tpu_custom_call.1} parent=1 // pred_check_branch
      %8 = sbr.rel (0) target = $region5
    $region4: #{tpu_custom_call.1} parent=1 // pred_region
      %s10 = ssub.s32 128, 128
      %11 = vsyncadd [#allocation3], %s10
      %s13 = sshll.u32 [#allocation2], 4
      %s14 = int_to_ptr.vmem [resolvable:$true] %s13
      %16 = dma.hbm_to_vmem [thread:$0]  %s0, 128, %s14, [#allocation3]
    $region5: #{tpu_custom_call.1} parent=1 // pred_fallthru
      _
    // Predicated region
    $region6: #{tpu_custom_call.1} parent=1 // pred_check
      _
    $region7: #{tpu_custom_call.1} parent=1 // pred_check_branch
      %18 = sbr.rel (0) target = $region9
    $region8: #{tpu_custom_call.1} parent=1 // pred_region
      %19 = dma.done [#allocation3], 128
    $region9: #{tpu_custom_call.1} parent=1 // pred_fallthru
      _
    %v20 = vld [vmem:[#allocation2] sm:$0xff]
    %vm21 = vcmask 261120
    %v22 = vsel %vm21, %v20, -inf
    %23 = vmax.xlane.f32.xlu0 %v22
    %v24 = vpop.xlane.xlu0 %23
    %v25 = vsub.f32 %v20, %v24
    %v26 = vmul.f32 %v25, 1.442695
    %v27 = vpow.pop %v26
    %v28 = vsel %vm21, %v27, 0.0
    %29 = vadd.xlane.f32.xlu0 %v28
    %v30 = vpop.xlane.xlu0 %29
    %v31 = vmul.f32 %v27, %v25
    %v32 = vsel %vm21, %v31, 0.0
    %33 = vadd.xlane.f32.xlu0 %v32
    %v34 = vpop.xlane.xlu0 %33
    %v35 = vlog2.pop %v30
    %v36 = vmul.f32 %v35, 0.6931472
    %v37 = vrcp.pop %v30
    %v38 = vmul.f32 %v34, %v37
    %v39 = vsub.f32 %v36, %v38
    %vm40 = vcmask 7168
    %41 = vst.msk [vmem:[%s1] sm:$0xff] %vm40, %v39
    // Predicated region
    $region10: #{tpu_custom_call.1} parent=1 // pred_check
      _
    $region11: #{tpu_custom_call.1} parent=1 // pred_check_branch
      %43 = sbr.rel (0) target = $region13
    $region12: #{tpu_custom_call.1} parent=1 // pred_region
      _
    $region13: #{tpu_custom_call.1} parent=1 // pred_fallthru
      _
    // Predicated region
    $region14: #{tpu_custom_call.1} parent=1 // pred_check
      _
    $region15: #{tpu_custom_call.1} parent=1 // pred_check_branch
      %45 = sbr.rel (0) target = $region17
    $region16: #{tpu_custom_call.1} parent=1 // pred_region
      _
    $region17: #{tpu_custom_call.1} parent=1 // pred_fallthru
      _
    %46 = vsyncpa [#allocation3], 1

</llo_original>
